<compile_context>
chip_gen: v6e
topology: v6e:2x2x1
jax: 0.10.0
libtpu: 0.0.40
codegen_flags: <defaults>
</compile_context>

<pallas_src>
import functools

import numpy as np
import jax
import jax.numpy as jnp
from jax.experimental import pallas as pl
from jax.experimental.pallas import tpu as pltpu

# The six 3x3 masks from the PyTorch module (rows = ky, cols = kx).
FILTER_MATS = [
    [[1.0, 0.0, 0.0], [0.0, 1.0, 0.0], [0.0, 0.0, 1.0]],  # 1: main diagonal
    [[0.0, 0.0, 1.0], [0.0, 1.0, 0.0], [1.0, 0.0, 0.0]],  # 2: anti diagonal
    [[1.0, 0.0, 1.0], [0.0, 1.0, 0.0], [1.0, 0.0, 1.0]],  # 3: corners + center
    [[0.0, 1.0, 0.0], [1.0, 1.0, 1.0], [0.0, 1.0, 0.0]],  # 4: plus
    [[0.0, 0.0, 0.0], [1.0, 1.0, 1.0], [0.0, 0.0, 0.0]],  # 5: horizontal
    [[0.0, 1.0, 0.0], [0.0, 1.0, 0.0], [0.0, 1.0, 0.0]],  # 6: vertical
]

# Non-center neighbor offsets (dy, dx), grouped in +/- pairs per direction:
#   0,1: main-diagonal   2,3: anti-diagonal   4,5: horizontal   6,7: vertical
NEIGHBOR_OFFSETS = (
    (1, 1), (-1, -1),
    (1, -1), (-1, 1),
    (0, 1), (0, -1),
    (1, 0), (-1, 0),
)


def _roll_probe_kernel(x_ref, o_ref):
    o_ref[...] = pltpu.roll(x_ref[...], 1, axis=1)


@functools.lru_cache(maxsize=None)
def _roll_matches_numpy():
    """Portability check: detect pltpu.roll's rotation convention once.

    np.roll(x, 1, axis=1)[0, 0] == x[0, -1]; the opposite circular convention
    would give x[0, 1].  Either way the kernel below stays exact.
    """
    x = jnp.arange(8 * 128, dtype=jnp.float32).reshape(8, 128)
    y = pl.pallas_call(
        _roll_probe_kernel,
        out_shape=jax.ShapeDtypeStruct((8, 128), jnp.float32),
    )(x)
    return bool(y[0, 0] == 127.0)


def dirpool_kernel(x_ref, m_ref, o_ref, *, W, HW, roll_is_numpy):
    """x_ref: (Bt, C, HW)   m_ref: (8, 1, HW) 0/1 masks   o_ref: (6, Bt, HW)."""
    x = x_ref[...].astype(jnp.float32)
    s = jnp.sum(x, axis=1)                      # (Bt, HW): channel reduction

    def neighbor(k):
        # Masked shifted plane: y[:, p] = S[:, p + off] if the (dy, dx) step
        # stays inside the HxW image, else exactly 0 (conv zero padding).
        dy, dx = NEIGHBOR_OFFSETS[k]
        off = dy * W + dx
        shift = (-off) % HW if roll_is_numpy else off % HW
        rolled = pltpu.roll(s, shift, axis=1)   # XLU lane rotation
        valid = jnp.broadcast_to(m_ref[k], s.shape) != 0.0
        return jnp.where(valid, rolled, 0.0)

    # Shared partial sums keep at most ~4 (Bt, HW) planes live at once.
    diag = neighbor(0) + neighbor(1)
    anti = neighbor(2) + neighbor(3)
    o_ref[0] = jnp.maximum(s + diag, 0.0).astype(o_ref.dtype)         # filter1
    o_ref[1] = jnp.maximum(s + anti, 0.0).astype(o_ref.dtype)         # filter2
    o_ref[2] = jnp.maximum(s + diag + anti, 0.0).astype(o_ref.dtype)  # filter3

    horiz = neighbor(4) + neighbor(5)
    vert = neighbor(6) + neighbor(7)
    o_ref[3] = jnp.maximum(s + horiz + vert, 0.0).astype(o_ref.dtype)  # filter4
    o_ref[4] = jnp.maximum(s + horiz, 0.0).astype(o_ref.dtype)         # filter5
    o_ref[5] = jnp.maximum(s + vert, 0.0).astype(o_ref.dtype)          # filter6


def _neighbor_masks(H, W):
    """(8, 1, H*W) float32 validity masks (1.0 in-bounds, 0.0 at the border)."""
    h = np.arange(H)[:, None]
    w = np.arange(W)[None, :]
    ms = []
    for dy, dx in NEIGHBOR_OFFSETS:
        valid = (h + dy >= 0) & (h + dy < H) & (w + dx >= 0) & (w + dx < W)
        ms.append(valid.astype(np.float32).reshape(H * W))
    return jnp.asarray(np.stack(ms)[:, None, :])


def _pick_batch_tile(B, bytes_per_image, budget=1 << 20):
    """Batch tile: Bt == B, or a multiple of 8 dividing B (out-block tiling)."""
    if B * bytes_per_image <= budget:
        return B
    best = B
    for bt in range(8, B, 8):
        if B % bt == 0 and bt * bytes_per_image <= budget:
            best = bt
    return best


def dirpooling_forward(x, out_channels):
    """x: (B, C, H, W) float -> (B, out_channels, H, W), matching dirpooling."""
    B, C, H, W = x.shape
    assert out_channels % 6 == 0
    G = out_channels // 6
    HW = H * W  # lane-dense when H*W is a multiple of 128 (e.g. 16*16 = 256)

    xf = x.reshape(B, C, HW)             # free reshape to lane-dense layout
    masks = _neighbor_masks(H, W)
    Bt = _pick_batch_tile(B, C * HW * 4)
    grid = (B // Bt,)

    kernel = functools.partial(
        dirpool_kernel, W=W, HW=HW, roll_is_numpy=_roll_matches_numpy())

    y = pl.pallas_call(
        kernel,
        out_shape=jax.ShapeDtypeStruct((6, B, HW), jnp.float32),
        grid_spec=pltpu.PrefetchScalarGridSpec(
            num_scalar_prefetch=0,
            grid=grid,
            in_specs=[
                pl.BlockSpec((Bt, C, HW), lambda b: (b, 0, 0)),
                pl.BlockSpec((8, 1, HW), lambda b: (0, 0, 0)),
            ],
            out_specs=pl.BlockSpec((6, Bt, HW), lambda b: (0, b, 0)),
        ),
        compiler_params=pltpu.CompilerParams(
            dimension_semantics=("parallel",),
            vmem_limit_bytes=32 * 1024 * 1024,
        ),
    )(xf, masks)

    # Replicate each filter's plane across its G identical output channels
    # outside the kernel (cuts HBM writeback by G; XLA fuses the broadcast).
    y = jnp.transpose(y, (1, 0, 2))                       # (B, 6, HW)
    y = jnp.broadcast_to(y[:, :, None, :], (B, 6, G, HW))
    return y.reshape(B, 6 * G, H, W).astype(x.dtype)


def dirpooling_reference(x, out_channels):
    """Pure-JAX reference matching the PyTorch forward exactly."""
    C = x.shape[1]
    G = out_channels // 6
    outs = []
    for mat in FILTER_MATS:
        f = jnp.array(mat, jnp.float32)
        w = jnp.broadcast_to(f[None, None], (G, C, 3, 3))
        y = jax.lax.conv_general_dilated(
            x, w, window_strides=(1, 1), padding=((1, 1), (1, 1)),
            dimension_numbers=("NCHW", "OIHW", "NCHW"),
        )
        outs.append(y)
    return jnp.maximum(jnp.concatenate(outs, axis=1), 0.0)


if __name__ == "__main__":
    B, C, H, W = 2, 4, 16, 16
    out_channels = 12  # 6 filters x 2 identical channels each

    key = jax.random.PRNGKey(0)
    x = jax.random.normal(key, (B, C, H, W), dtype=jnp.float32)

    out = jax.block_until_ready(dirpooling_forward(x, out_channels))
    ref = dirpooling_reference(x, out_channels)

    assert out.shape == (B, out_channels, H, W), out.shape
    assert jnp.allclose(out, ref, atol=1e-4, rtol=1e-4), "mismatch vs reference"

    print("KERNEL_OK")
</pallas_src>

<mosaic_0001>
module attributes {stable_mosaic.version = 11 : i64} {
  func.func @_roll_probe_kernel(%arg0: memref<8x128xf32, #tpu.memory_space<vmem>>, %arg1: memref<8x128xf32, #tpu.memory_space<vmem>>) attributes {dimension_semantics = [], scalar_prefetch = 0 : i64, scratch_operands = 0 : i64, tpu.core_type = #tpu.core_type<tc>} {
    %c0 = arith.constant 0 : index
    %c0_0 = arith.constant 0 : index
    %0 = vector.load %arg0[%c0, %c0_0] : memref<8x128xf32, #tpu.memory_space<vmem>>, vector<8x128xf32>
    %c1_i32 = arith.constant 1 : i32
    %1 = tpu.dynamic_rotate %0 by %c1_i32 dim 1 : vector<8x128xf32>, i32 -> vector<8x128xf32>
    %c0_1 = arith.constant 0 : index
    %c0_2 = arith.constant 0 : index
    %2 = vector.load %arg1[%c0_1, %c0_2] : memref<8x128xf32, #tpu.memory_space<vmem>>, vector<8x128xf32>
    tpu.vector_store %arg1[%c0_1, %c0_2], %1 {strides = array<i32>} : memref<8x128xf32, #tpu.memory_space<vmem>>, vector<8x128xf32>,
    return
  }
}

</mosaic_0001>

<llo_original>
// kernel: tpu_custom_call.1
$region0: #{tpu_custom_call.1}
  #allocation0 [shape = 'u32[]', space=smem, size = 0x4, offset = 0x4, fixed_abs, tag = 'smem constant byte address 0x4 - core index']
  #allocation1 [shape = 'u32[144,128]{1,0:T(1,128)}', space=vmem, size = 0x12000, scoped, tag = 'internal scratch']
  %s0 = inlined_call_operand.hbm [shape: f32[8,128], index: 0, kind: input, shape index: {}]
  %s1 = inlined_call_operand.hbm [shape: f32[8,128], index: 1, kind: output, shape index: {}]
  %s2 = sld [smem:[#allocation0]]
  $region18: #{tpu_custom_call.1} parent=0
    _
  %s4 = ssub.s32 1, %s2
  %s5 = scalar_select 0, %s4, %s2
  $region1: #{tpu_custom_call.1} parent=0
    #allocation2 [shape = 'u8[4096]{0}', space=vmem, size = 0x1000, scoped, tag = 'input window, operand 0, single buffered']
    #allocation3 [shape = 's32[1]{0}', space=sflag, size = 0x4, scoped, tag = 'scoped memory for tpu_custom_call.1']
    #allocation4 [shape = 's32[1]{0}', space=sflag, size = 0x4, scoped, tag = 'scoped memory for tpu_custom_call.1']
    #allocation5 [shape = 'u8[4096]{0}', space=vmem, size = 0x1000, scoped, tag = 'output window, operand 0, single buffered']
    %6 = vsyncpa [#allocation3], 0
    %7 = vsyncpa [#allocation4], 0
    // Predicated region
    $region2: #{tpu_custom_call.1} parent=1 // pred_check
      _
    $region3: #{tpu_custom_call.1} parent=1 // pred_check_branch
      %9 = sbr.rel (0) target = $region5
    $region4: #{tpu_custom_call.1} parent=1 // pred_region
      %s11 = ssub.s32 128, 128
      %12 = vsyncadd [#allocation3], %s11
      %s14 = sshll.u32 [#allocation2], 4
      %s15 = int_to_ptr.vmem [resolvable:$true] %s14
      %17 = dma.hbm_to_vmem [thread:$0]  %s0, 128, %s15, [#allocation3]
    $region5: #{tpu_custom_call.1} parent=1 // pred_fallthru
      _
    // Predicated region
    $region6: #{tpu_custom_call.1} parent=1 // pred_check
      _
    $region7: #{tpu_custom_call.1} parent=1 // pred_check_branch
      %19 = sbr.rel (0) target = $region9
    $region8: #{tpu_custom_call.1} parent=1 // pred_region
      %20 = dma.done [#allocation3], 128
    $region9: #{tpu_custom_call.1} parent=1 // pred_fallthru
      _
    %v21 = vld [vmem:[#allocation2] sm:$0xff]
    %22 = vrot.lane.b32.xlu0 %v21, 1
    %v23 = vpop.permute.xlu0 %22
    %24 = vst [vmem:[#allocation5] sm:$0xff] %v23
    // Predicated region
    $region10: #{tpu_custom_call.1} parent=1 // pred_check
      _
    $region11: #{tpu_custom_call.1} parent=1 // pred_check_branch
      %26 = sbr.rel (0) target = $region13
    $region12: #{tpu_custom_call.1} parent=1 // pred_region
      %s28 = ssub.s32 128, 128
      %29 = vsyncadd [#allocation4], %s28
      %s31 = sshll.u32 [#allocation5], 4
      %s32 = int_to_ptr.vmem [resolvable:$true] %s31
      %34 = dma.vmem_to_hbm [thread:$0]  %s32, 128, %s1, [#allocation4]
    $region13: #{tpu_custom_call.1} parent=1 // pred_fallthru
      _
    // Predicated region
    $region14: #{tpu_custom_call.1} parent=1 // pred_check
      _
    $region15: #{tpu_custom_call.1} parent=1 // pred_check_branch
      %36 = sbr.rel (0) target = $region17
    $region16: #{tpu_custom_call.1} parent=1 // pred_region
      %37 = dma.done [#allocation4], 128
    $region17: #{tpu_custom_call.1} parent=1 // pred_fallthru
      _
    %38 = vsyncpa [#allocation3], 1
    %39 = vsyncpa [#allocation4], 1

</llo_original>
